<compile_context>
chip_gen: v6e
topology: v6e:2x2x1
jax: 0.10.0
libtpu: 0.0.40
codegen_flags: <defaults>
</compile_context>

<pallas_src>
import math
import jax
import jax.numpy as jnp
from jax.experimental import pallas as pl
from jax.experimental.pallas import tpu as pltpu

PAD = 0            # Constants.PAD
_LN_EPS = 1e-12
_MASK_VAL = -1000.0


def _round_up(n, m):
    return ((n + m - 1) // m) * m


# ----------------------------- Pallas kernels -----------------------------

def _layernorm_f32(x, g, b):
    """LayerNorm with eps=1e-12 and biased variance (matches nn.LayerNorm)."""
    x = x.astype(jnp.float32)
    mu = jnp.mean(x, axis=-1, keepdims=True)
    xc = x - mu
    var = jnp.mean(xc * xc, axis=-1, keepdims=True)
    return g * (xc * jax.lax.rsqrt(var + _LN_EPS)) + b


def _ib_logits(xnb, et_ref, wmu_ref, bmu_ref, wemb_ref):
    """IB path: (xn @ W_mu^T + b_mu) @ (W_emb @ E^T), all MXU, f32 accumulate.

    TODO(synk): VIB internals are not provided; a deterministic mu-projection
    stands in for the bottleneck feature.
    """
    feat = jnp.dot(xnb, wmu_ref[...],
                   preferred_element_type=jnp.float32) + bmu_ref[...]     # (tm, C)
    pe = jnp.dot(wemb_ref[...], et_ref[...],
                 preferred_element_type=jnp.float32)                      # (C, U)
    return jnp.dot(feat.astype(jnp.bfloat16), pe.astype(jnp.bfloat16),
                   preferred_element_type=jnp.float32)                    # (tm, U)


def _past_logits_kernel(x_ref, g_ref, b_ref, et_ref, wmu_ref, bmu_ref,
                        wemb_ref, seen_ref, noib_ref, mask_ref, ib_ref):
    """Fused LN + noib / masked-noib / ib logits for one past row tile."""
    xn = _layernorm_f32(x_ref[...], g_ref[...], b_ref[...])
    xnb = xn.astype(jnp.bfloat16)

    # ---- no-IB logits (stored immediately to shorten the (tm,U) live range) --
    noib = jnp.dot(xnb, et_ref[...], preferred_element_type=jnp.float32)
    noib_ref[...] = noib

    # ---- previous-user mask from the compact "seen ids" table ----
    tm, U = noib.shape
    col = jax.lax.broadcasted_iota(jnp.int32, (tm, U), 1)
    seen_ids = seen_ref[...]                                             # (tm, L+1)
    terms = [seen_ids[:, s:s + 1] == col for s in range(seen_ids.shape[1])]
    while len(terms) > 1:                                                # balanced OR tree
        nxt = [jnp.logical_or(terms[i], terms[i + 1])
               for i in range(0, len(terms) - 1, 2)]
        if len(terms) % 2:
            nxt.append(terms[-1])
        terms = nxt
    mask = jnp.where(terms[0], jnp.float32(_MASK_VAL), jnp.float32(0.0))
    mask_ref[...] = noib + mask

    # ---- IB logits last (noib / mask no longer live) ----
    ib_ref[...] = _ib_logits(xnb, et_ref, wmu_ref, bmu_ref, wemb_ref)


def _future_logits_kernel(x_ref, g_ref, b_ref, et_ref, wmu_ref, bmu_ref,
                          wemb_ref, noib_ref, ib_ref):
    """Fused LN + noib / ib logits for one future row tile (no mask output)."""
    xn = _layernorm_f32(x_ref[...], g_ref[...], b_ref[...])
    xnb = xn.astype(jnp.bfloat16)
    noib_ref[...] = jnp.dot(xnb, et_ref[...], preferred_element_type=jnp.float32)
    ib_ref[...] = _ib_logits(xnb, et_ref, wmu_ref, bmu_ref, wemb_ref)


# ------------------------------ tiling plan ---------------------------------

def _tpu_vmem_capacity():
    try:
        cap = getattr(pltpu.get_tpu_info(), "vmem_capacity_bytes", None)
        if cap:
            return int(cap)
    except Exception:
        pass
    return 128 * 1024 * 1024


def _vmem_estimate(tm, H, U, C, Lp1):
    """Conservative per-step VMEM estimate (double-buffered I/O + live temps)."""
    f32, bf16 = 4, 2
    b = 0
    b += 2 * tm * H * f32                              # x tile (x2 buffers)
    b += 2 * tm * _round_up(Lp1, 128) * f32            # seen tile, lane-padded
    b += 2 * (H * U + H * C + C * H) * bf16            # resident weights
    b += 3 * 2 * tm * U * f32                          # <=3 outputs, x2 buffers
    b += 4 * tm * U * f32                              # (tm,U) temporaries
    b += 3 * C * U * f32                               # pe (+ bf16 copy)
    b += 1 << 20                                       # misc headroom
    return b


def _plan_tiles(BL, H, U, C, Lp1):
    """Pick the row tile from the VMEM budget and an explicit vmem limit."""
    cap = _tpu_vmem_capacity()
    budget = int(cap * 0.4)
    row_cap = _round_up(max(BL, 1), 8)                 # never exceed the (padded) rows
    tm = min(8, row_cap)
    for cand in (512, 384, 256, 192, 128, 96, 64, 32, 16, 8):
        if cand > row_cap:
            continue
        if _vmem_estimate(cand, H, U, C, Lp1) <= budget:
            tm = cand
            break
    est = _vmem_estimate(tm, H, U, C, Lp1)
    limit = int(min(max(32 << 20, 2 * est), int(cap * 0.8)))
    return tm, limit


# ------------------------------ pallas wrapper ------------------------------

def _logits_pallas_call(x, seen, ln_g, ln_b, et, wmu_t, b_mu, wemb,
                        *, tm, vmem_limit):
    """One direction.  seen=None -> future (noib, ib); else past (+masked)."""
    BLp, H = x.shape
    U = et.shape[1]
    C = wmu_t.shape[1]
    nt = BLp // tm

    common_in_specs = [
        pl.BlockSpec((tm, H), lambda i: (i, 0)),      # pre-LN x
        pl.BlockSpec((1, H), lambda i: (0, 0)),       # ln gamma
        pl.BlockSpec((1, H), lambda i: (0, 0)),       # ln beta
        pl.BlockSpec((H, U), lambda i: (0, 0)),       # user_emb^T (bf16)
        pl.BlockSpec((H, C), lambda i: (0, 0)),       # ib_w_mu^T  (bf16)
        pl.BlockSpec((1, C), lambda i: (0, 0)),       # ib_b_mu    (f32)
        pl.BlockSpec((C, H), lambda i: (0, 0)),       # w_emb      (bf16)
    ]
    out_spec = pl.BlockSpec((tm, U), lambda i: (i, 0))
    out_sds = jax.ShapeDtypeStruct((BLp, U), jnp.float32)

    if seen is not None:
        Lp1 = seen.shape[1]
        in_specs = common_in_specs + [pl.BlockSpec((tm, Lp1), lambda i: (i, 0))]
        out_shape = (out_sds, out_sds, out_sds)
        out_specs = [out_spec, out_spec, out_spec]
        kernel = _past_logits_kernel
        args = (x, ln_g, ln_b, et, wmu_t, b_mu, wemb, seen)
    else:
        in_specs = common_in_specs
        out_shape = (out_sds, out_sds)
        out_specs = [out_spec, out_spec]
        kernel = _future_logits_kernel
        args = (x, ln_g, ln_b, et, wmu_t, b_mu, wemb)

    return pl.pallas_call(
        kernel,
        out_shape=out_shape,
        grid_spec=pltpu.PrefetchScalarGridSpec(
            num_scalar_prefetch=0,
            grid=(nt,),
            in_specs=in_specs,
            out_specs=out_specs),
        compiler_params=pltpu.CompilerParams(
            dimension_semantics=("parallel",),
            vmem_limit_bytes=vmem_limit),
    )(*args)


# ------------------------------ forward -------------------------------------

@jax.jit
def ducdiff_forward(params, cas_seq, label):
    B, L = cas_seq.shape
    E = params["user_emb"]            # (U, H) f32, gather orientation
    Et = params["user_emb_t"]         # (H, U) bf16, matmul orientation
    U, H = E.shape
    C = params["ib_w_mu_t"].shape[1]
    BL = B * L

    # emb_dropout / dropout are identity in eval mode.
    # TODO(synk): self.past_GD / self.future_GD are not defined in the provided
    # __init__; the LayerNorm'd embeddings (computed in-kernel) stand in.
    pos = params["pos_emb"][:L]
    x_past = (E[cas_seq] + pos[None]).reshape(BL, H)
    x_future = (E[label] + pos[None]).reshape(BL, H)

    # Compact representation of get_previous_user_mask:
    #   seen[b*L+t, s] = cas_seq[b, s] if s <= t else -1, plus a 0 column
    #   (user 0 / PAD is always masked).  Only the past direction uses it.
    t_idx = jnp.arange(L, dtype=jnp.int32)
    keep = t_idx[None, :] <= t_idx[:, None]                        # (L, L)
    seen = jnp.where(keep[None], cas_seq[:, None, :], -1)          # (B, L, L)
    seen = jnp.concatenate([seen, jnp.zeros((B, L, 1), seen.dtype)], axis=-1)
    seen = seen.reshape(BL, L + 1).astype(jnp.int32)

    tm, vmem_limit = _plan_tiles(BL, H, U, C, L + 1)
    BLp = _round_up(BL, tm)
    if BLp != BL:
        pad = BLp - BL
        x_past = jnp.pad(x_past, ((0, pad), (0, 0)))
        x_future = jnp.pad(x_future, ((0, pad), (0, 0)))
        seen = jnp.pad(seen, ((0, pad), (0, 0)), constant_values=-1)

    ln_g = params["ln_g"].reshape(1, H)
    ln_b = params["ln_b"].reshape(1, H)
    b_mu = params["ib_b_mu"].reshape(1, C)

    p_noib, p_mask, p_ib = _logits_pallas_call(
        x_past, seen, ln_g, ln_b, Et, params["ib_w_mu_t"], b_mu,
        params["w_emb_past"], tm=tm, vmem_limit=vmem_limit)
    f_noib, f_ib = _logits_pallas_call(
        x_future, None, ln_g, ln_b, Et, params["ib_w_mu_t"], b_mu,
        params["w_emb_future"], tm=tm, vmem_limit=vmem_limit)

    if BLp != BL:
        p_noib, p_mask, p_ib = p_noib[:BL], p_mask[:BL], p_ib[:BL]
        f_noib, f_ib = f_noib[:BL], f_ib[:BL]

    return (p_mask,     # past_output_noib_mask
            p_noib,     # past_output_noib
            f_noib,     # future_output_noib
            p_ib,       # past_output_ib
            f_ib)       # future_output_ib


# ------------------------------ init ----------------------------------------

def init_params(key, user_size, hidden_size, compress_emb, max_len):
    stdv = 1.0 / math.sqrt(hidden_size)

    def u(k, shape):
        return jax.random.uniform(k, shape, jnp.float32, -stdv, stdv)

    ks = jax.random.split(key, 8)
    user_emb = u(ks[0], (user_size, hidden_size))
    ib_w_mu = u(ks[4], (compress_emb, hidden_size))
    return {
        "user_emb":     user_emb,                               # (U, H) f32 gather
        "user_emb_t":   user_emb.T.astype(jnp.bfloat16),        # (H, U) bf16 matmul RHS
        "pos_emb":      u(ks[1], (max_len, hidden_size)),
        "ln_g":         u(ks[2], (hidden_size,)),
        "ln_b":         u(ks[3], (hidden_size,)),
        "ib_w_mu_t":    ib_w_mu.T.astype(jnp.bfloat16),         # (H, C) bf16
        "ib_b_mu":      u(ks[5], (compress_emb,)),              # f32
        "w_emb_past":   u(ks[6], (compress_emb, hidden_size)).astype(jnp.bfloat16),
        "w_emb_future": u(ks[7], (compress_emb, hidden_size)).astype(jnp.bfloat16),
    }


# --------------------------------- main --------------------------------------

if __name__ == "__main__":
    USER_SIZE = 256
    HIDDEN = 32
    COMPRESS = 16
    MAX_LEN = 8
    B, L = 2, 8

    key = jax.random.PRNGKey(0)
    k_param, k_seq, k_lab = jax.random.split(key, 3)

    params = init_params(k_param, USER_SIZE, HIDDEN, COMPRESS, MAX_LEN)
    cas_seq = jax.random.randint(k_seq, (B, L), 0, USER_SIZE, dtype=jnp.int32)
    label = jax.random.randint(k_lab, (B, L), 0, USER_SIZE, dtype=jnp.int32)

    outs = ducdiff_forward(params, cas_seq, label)
    outs = jax.block_until_ready(outs)

    for o in outs:
        assert o.shape == (B * L, USER_SIZE), o.shape
        assert bool(jnp.all(jnp.isfinite(o)))

    # Structural check of the fused previous-user mask: masked - unmasked is
    # exactly {0, -1000}, and user 0 (PAD) is always masked.
    d = outs[0] - outs[1]
    assert bool(jnp.all((jnp.abs(d) < 1e-3) | (jnp.abs(d + 1000.0) < 1e-3)))
    assert bool(jnp.all(jnp.abs(d[:, 0] + 1000.0) < 1e-3))

    print("KERNEL_OK")
</pallas_src>

<mosaic_0001>
module attributes {stable_mosaic.version = 11 : i64} {
  func.func @_past_logits_kernel(%arg0: i32, %arg1: memref<16x32xf32, #tpu.memory_space<vmem>>, %arg2: memref<1x32xf32, #tpu.memory_space<vmem>>, %arg3: memref<1x32xf32, #tpu.memory_space<vmem>>, %arg4: memref<32x256xbf16, #tpu.memory_space<vmem>>, %arg5: memref<32x16xbf16, #tpu.memory_space<vmem>>, %arg6: memref<1x16xf32, #tpu.memory_space<vmem>>, %arg7: memref<16x32xbf16, #tpu.memory_space<vmem>>, %arg8: memref<16x9xi32, #tpu.memory_space<vmem>>, %arg9: memref<16x256xf32, #tpu.memory_space<vmem>>, %arg10: memref<16x256xf32, #tpu.memory_space<vmem>>, %arg11: memref<16x256xf32, #tpu.memory_space<vmem>>) attributes {dimension_semantics = [#tpu.dimension_semantics<parallel>], iteration_bounds = array<i64: 1>, scalar_prefetch = 0 : i64, scratch_operands = 0 : i64, tpu.core_type = #tpu.core_type<tc>, window_params = [{transform_indices = @transform_0, window_bounds = array<i64: 16, 32>}, {pipeline_mode = #tpu.pipeline_mode<synchronous>, transform_indices = @transform_1, window_bounds = array<i64: 1, 32>}, {pipeline_mode = #tpu.pipeline_mode<synchronous>, transform_indices = @transform_2, window_bounds = array<i64: 1, 32>}, {pipeline_mode = #tpu.pipeline_mode<synchronous>, transform_indices = @transform_3, window_bounds = array<i64: 32, 256>}, {pipeline_mode = #tpu.pipeline_mode<synchronous>, transform_indices = @transform_4, window_bounds = array<i64: 32, 16>}, {pipeline_mode = #tpu.pipeline_mode<synchronous>, transform_indices = @transform_5, window_bounds = array<i64: 1, 16>}, {pipeline_mode = #tpu.pipeline_mode<synchronous>, transform_indices = @transform_6, window_bounds = array<i64: 16, 32>}, {transform_indices = @transform_7, window_bounds = array<i64: 16, 9>}, {transform_indices = @transform_8, window_bounds = array<i64: 16, 256>}, {transform_indices = @transform_9, window_bounds = array<i64: 16, 256>}, {transform_indices = @transform_10, window_bounds = array<i64: 16, 256>}]} {
    %c0 = arith.constant 0 : index
    %c0_0 = arith.constant 0 : index
    %0 = vector.load %arg1[%c0, %c0_0] : memref<16x32xf32, #tpu.memory_space<vmem>>, vector<16x32xf32>
    %c0_1 = arith.constant 0 : index
    %c0_2 = arith.constant 0 : index
    %1 = vector.load %arg2[%c0_1, %c0_2] : memref<1x32xf32, #tpu.memory_space<vmem>>, vector<1x32xf32>
    %c0_3 = arith.constant 0 : index
    %c0_4 = arith.constant 0 : index
    %2 = vector.load %arg3[%c0_3, %c0_4] : memref<1x32xf32, #tpu.memory_space<vmem>>, vector<1x32xf32>
    %cst = arith.constant dense<0.000000e+00> : vector<16xf32>
    %3 = vector.multi_reduction <add>, %0, %cst [1] : vector<16x32xf32> to vector<16xf32>
    %4 = vector.shape_cast %3 : vector<16xf32> to vector<16x1xf32>
    %cst_5 = arith.constant 3.200000e+01 : f32
    %5 = vector.broadcast %cst_5 : f32 to vector<16x1xf32>
    %6 = arith.divf %4, %5 : vector<16x1xf32>
    %7 = vector.broadcast %6 : vector<16x1xf32> to vector<16x32xf32>
    %8 = arith.subf %0, %7 : vector<16x32xf32>
    %9 = arith.mulf %8, %8 : vector<16x32xf32>
    %cst_6 = arith.constant dense<0.000000e+00> : vector<16xf32>
    %10 = vector.multi_reduction <add>, %9, %cst_6 [1] : vector<16x32xf32> to vector<16xf32>
    %11 = vector.shape_cast %10 : vector<16xf32> to vector<16x1xf32>
    %cst_7 = arith.constant 3.200000e+01 : f32
    %12 = vector.broadcast %cst_7 : f32 to vector<16x1xf32>
    %13 = arith.divf %11, %12 : vector<16x1xf32>
    %cst_8 = arith.constant 9.99999996E-13 : f32
    %14 = vector.broadcast %cst_8 : f32 to vector<16x1xf32>
    %15 = arith.addf %13, %14 : vector<16x1xf32>
    %16 = math.rsqrt %15 : vector<16x1xf32>
    %17 = vector.broadcast %16 : vector<16x1xf32> to vector<16x32xf32>
    %18 = arith.mulf %8, %17 : vector<16x32xf32>
    %19 = vector.broadcast %1 : vector<1x32xf32> to vector<16x32xf32>
    %20 = arith.mulf %19, %18 : vector<16x32xf32>
    %21 = vector.broadcast %2 : vector<1x32xf32> to vector<16x32xf32>
    %22 = arith.addf %20, %21 : vector<16x32xf32>
    %23 = arith.truncf %22 : vector<16x32xf32> to vector<16x32xbf16>
    %c0_9 = arith.constant 0 : index
    %c0_10 = arith.constant 0 : index
    %24 = vector.load %arg4[%c0_9, %c0_10] : memref<32x256xbf16, #tpu.memory_space<vmem>>, vector<32x256xbf16>
    %cst_11 = arith.constant dense<0.000000e+00> : vector<16x256xf32>
    %25 = tpu.matmul %23, %24, %cst_11 {dimension_numbers = #tpu.dot_dimension_numbers<[1], [0], [0], [1], [0, 0, 1, 1], [], []>} : vector<16x32xbf16>, vector<32x256xbf16>, vector<16x256xf32> -> vector<16x256xf32>
    %c0_12 = arith.constant 0 : index
    %c0_13 = arith.constant 0 : index
    %26 = vector.load %arg9[%c0_12, %c0_13] : memref<16x256xf32, #tpu.memory_space<vmem>>, vector<16x256xf32>
    tpu.vector_store %arg9[%c0_12, %c0_13], %25 {strides = array<i32>} : memref<16x256xf32, #tpu.memory_space<vmem>>, vector<16x256xf32>,
    %27 = tpu.iota {dimensions = array<i32: 1>} : vector<16x256xi32>
    %c0_14 = arith.constant 0 : index
    %c0_15 = arith.constant 0 : index
    %28 = vector.load %arg8[%c0_14, %c0_15] : memref<16x9xi32, #tpu.memory_space<vmem>>, vector<16x9xi32>
    %29 = vector.extract_strided_slice %28 {offsets = [0, 0], sizes = [16, 1], strides = [1, 1]} : vector<16x9xi32> to vector<16x1xi32>
    %30 = vector.broadcast %29 : vector<16x1xi32> to vector<16x256xi32>
    %31 = arith.cmpi eq, %30, %27 : vector<16x256xi32>
    %32 = vector.extract_strided_slice %28 {offsets = [0, 1], sizes = [16, 1], strides = [1, 1]} : vector<16x9xi32> to vector<16x1xi32>
    %33 = vector.broadcast %32 : vector<16x1xi32> to vector<16x256xi32>
    %34 = arith.cmpi eq, %33, %27 : vector<16x256xi32>
    %35 = vector.extract_strided_slice %28 {offsets = [0, 2], sizes = [16, 1], strides = [1, 1]} : vector<16x9xi32> to vector<16x1xi32>
    %36 = vector.broadcast %35 : vector<16x1xi32> to vector<16x256xi32>
    %37 = arith.cmpi eq, %36, %27 : vector<16x256xi32>
    %38 = vector.extract_strided_slice %28 {offsets = [0, 3], sizes = [16, 1], strides = [1, 1]} : vector<16x9xi32> to vector<16x1xi32>
    %39 = vector.broadcast %38 : vector<16x1xi32> to vector<16x256xi32>
    %40 = arith.cmpi eq, %39, %27 : vector<16x256xi32>
    %41 = vector.extract_strided_slice %28 {offsets = [0, 4], sizes = [16, 1], strides = [1, 1]} : vector<16x9xi32> to vector<16x1xi32>
    %42 = vector.broadcast %41 : vector<16x1xi32> to vector<16x256xi32>
    %43 = arith.cmpi eq, %42, %27 : vector<16x256xi32>
    %44 = vector.extract_strided_slice %28 {offsets = [0, 5], sizes = [16, 1], strides = [1, 1]} : vector<16x9xi32> to vector<16x1xi32>
    %45 = vector.broadcast %44 : vector<16x1xi32> to vector<16x256xi32>
    %46 = arith.cmpi eq, %45, %27 : vector<16x256xi32>
    %47 = vector.extract_strided_slice %28 {offsets = [0, 6], sizes = [16, 1], strides = [1, 1]} : vector<16x9xi32> to vector<16x1xi32>
    %48 = vector.broadcast %47 : vector<16x1xi32> to vector<16x256xi32>
    %49 = arith.cmpi eq, %48, %27 : vector<16x256xi32>
    %50 = vector.extract_strided_slice %28 {offsets = [0, 7], sizes = [16, 1], strides = [1, 1]} : vector<16x9xi32> to vector<16x1xi32>
    %51 = vector.broadcast %50 : vector<16x1xi32> to vector<16x256xi32>
    %52 = arith.cmpi eq, %51, %27 : vector<16x256xi32>
    %53 = vector.extract_strided_slice %28 {offsets = [0, 8], sizes = [16, 1], strides = [1, 1]} : vector<16x9xi32> to vector<16x1xi32>
    %54 = vector.broadcast %53 : vector<16x1xi32> to vector<16x256xi32>
    %55 = arith.cmpi eq, %54, %27 : vector<16x256xi32>
    %56 = arith.ori %31, %34 : vector<16x256xi1>
    %57 = arith.ori %37, %40 : vector<16x256xi1>
    %58 = arith.ori %43, %46 : vector<16x256xi1>
    %59 = arith.ori %49, %52 : vector<16x256xi1>
    %60 = arith.ori %56, %57 : vector<16x256xi1>
    %61 = arith.ori %58, %59 : vector<16x256xi1>
    %62 = arith.ori %60, %61 : vector<16x256xi1>
    %63 = arith.ori %62, %55 : vector<16x256xi1>
    %cst_16 = arith.constant -1.000000e+03 : f32
    %cst_17 = arith.constant 0.000000e+00 : f32
    %64 = vector.broadcast %cst_16 : f32 to vector<16x256xf32>
    %65 = vector.broadcast %cst_17 : f32 to vector<16x256xf32>
    %66 = arith.select %63, %64, %65 : vector<16x256xi1>, vector<16x256xf32>
    %67 = arith.addf %25, %66 : vector<16x256xf32>
    %c0_18 = arith.constant 0 : index
    %c0_19 = arith.constant 0 : index
    %68 = vector.load %arg10[%c0_18, %c0_19] : memref<16x256xf32, #tpu.memory_space<vmem>>, vector<16x256xf32>
    tpu.vector_store %arg10[%c0_18, %c0_19], %67 {strides = array<i32>} : memref<16x256xf32, #tpu.memory_space<vmem>>, vector<16x256xf32>,
    %c0_20 = arith.constant 0 : index
    %c0_21 = arith.constant 0 : index
    %69 = vector.load %arg5[%c0_20, %c0_21] : memref<32x16xbf16, #tpu.memory_space<vmem>>, vector<32x16xbf16>
    %cst_22 = arith.constant dense<0.000000e+00> : vector<16x16xf32>
    %70 = tpu.matmul %23, %69, %cst_22 {dimension_numbers = #tpu.dot_dimension_numbers<[1], [0], [0], [1], [0, 0, 1, 1], [], []>} : vector<16x32xbf16>, vector<32x16xbf16>, vector<16x16xf32> -> vector<16x16xf32>
    %c0_23 = arith.constant 0 : index
    %c0_24 = arith.constant 0 : index
    %71 = vector.load %arg6[%c0_23, %c0_24] : memref<1x16xf32, #tpu.memory_space<vmem>>, vector<1x16xf32>
    %72 = vector.broadcast %71 : vector<1x16xf32> to vector<16x16xf32>
    %73 = arith.addf %70, %72 : vector<16x16xf32>
    %c0_25 = arith.constant 0 : index
    %c0_26 = arith.constant 0 : index
    %74 = vector.load %arg7[%c0_25, %c0_26] : memref<16x32xbf16, #tpu.memory_space<vmem>>, vector<16x32xbf16>
    %c0_27 = arith.constant 0 : index
    %c0_28 = arith.constant 0 : index
    %75 = vector.load %arg4[%c0_27, %c0_28] : memref<32x256xbf16, #tpu.memory_space<vmem>>, vector<32x256xbf16>
    %cst_29 = arith.constant dense<0.000000e+00> : vector<16x256xf32>
    %76 = tpu.matmul %74, %75, %cst_29 {dimension_numbers = #tpu.dot_dimension_numbers<[1], [0], [0], [1], [0, 0, 1, 1], [], []>} : vector<16x32xbf16>, vector<32x256xbf16>, vector<16x256xf32> -> vector<16x256xf32>
    %77 = arith.truncf %73 : vector<16x16xf32> to vector<16x16xbf16>
    %78 = arith.truncf %76 : vector<16x256xf32> to vector<16x256xbf16>
    %cst_30 = arith.constant dense<0.000000e+00> : vector<16x256xf32>
    %79 = tpu.matmul %77, %78, %cst_30 {dimension_numbers = #tpu.dot_dimension_numbers<[1], [0], [0], [1], [0, 0, 1, 1], [], []>} : vector<16x16xbf16>, vector<16x256xbf16>, vector<16x256xf32> -> vector<16x256xf32>
    %c0_31 = arith.constant 0 : index
    %c0_32 = arith.constant 0 : index
    %80 = vector.load %arg11[%c0_31, %c0_32] : memref<16x256xf32, #tpu.memory_space<vmem>>, vector<16x256xf32>
    tpu.vector_store %arg11[%c0_31, %c0_32], %79 {strides = array<i32>} : memref<16x256xf32, #tpu.memory_space<vmem>>, vector<16x256xf32>,
    return
  }
  func.func @transform_0(%arg0: i32) -> (i32, i32) {
    %c0_i32 = arith.constant 0 : i32
    %c0_i32_0 = arith.constant 0 : i32
    return %arg0, %c0_i32 : i32, i32
  }
  func.func @transform_1(%arg0: i32) -> (i32, i32) {
    %c0_i32 = arith.constant 0 : i32
    %c0_i32_0 = arith.constant 0 : i32
    %c0_i32_1 = arith.constant 0 : i32
    return %c0_i32, %c0_i32_0 : i32, i32
  }
  func.func @transform_2(%arg0: i32) -> (i32, i32) {
    %c0_i32 = arith.constant 0 : i32
    %c0_i32_0 = arith.constant 0 : i32
    %c0_i32_1 = arith.constant 0 : i32
    return %c0_i32, %c0_i32_0 : i32, i32
  }
  func.func @transform_3(%arg0: i32) -> (i32, i32) {
    %c0_i32 = arith.constant 0 : i32
    %c0_i32_0 = arith.constant 0 : i32
    %c0_i32_1 = arith.constant 0 : i32
    return %c0_i32, %c0_i32_0 : i32, i32
  }
  func.func @transform_4(%arg0: i32) -> (i32, i32) {
    %c0_i32 = arith.constant 0 : i32
    %c0_i32_0 = arith.constant 0 : i32
    %c0_i32_1 = arith.constant 0 : i32
    return %c0_i32, %c0_i32_0 : i32, i32
  }
  func.func @transform_5(%arg0: i32) -> (i32, i32) {
    %c0_i32 = arith.constant 0 : i32
    %c0_i32_0 = arith.constant 0 : i32
    %c0_i32_1 = arith.constant 0 : i32
    return %c0_i32, %c0_i32_0 : i32, i32
  }
  func.func @transform_6(%arg0: i32) -> (i32, i32) {
    %c0_i32 = arith.constant 0 : i32
    %c0_i32_0 = arith.constant 0 : i32
    %c0_i32_1 = arith.constant 0 : i32
    return %c0_i32, %c0_i32_0 : i32, i32
  }
  func.func @transform_7(%arg0: i32) -> (i32, i32) {
    %c0_i32 = arith.constant 0 : i32
    %c0_i32_0 = arith.constant 0 : i32
    return %arg0, %c0_i32 : i32, i32
  }
  func.func @transform_8(%arg0: i32) -> (i32, i32) {
    %c0_i32 = arith.constant 0 : i32
    %c0_i32_0 = arith.constant 0 : i32
    return %arg0, %c0_i32 : i32, i32
  }
  func.func @transform_9(%arg0: i32) -> (i32, i32) {
    %c0_i32 = arith.constant 0 : i32
    %c0_i32_0 = arith.constant 0 : i32
    return %arg0, %c0_i32 : i32, i32
  }
  func.func @transform_10(%arg0: i32) -> (i32, i32) {
    %c0_i32 = arith.constant 0 : i32
    %c0_i32_0 = arith.constant 0 : i32
    return %arg0, %c0_i32 : i32, i32
  }
}

module attributes {stable_mosaic.version = 11 : i64} {
  func.func @_future_logits_kernel(%arg0: i32, %arg1: memref<16x32xf32, #tpu.memory_space<vmem>>, %arg2: memref<1x32xf32, #tpu.memory_space<vmem>>, %arg3: memref<1x32xf32, #tpu.memory_space<vmem>>, %arg4: memref<32x256xbf16, #tpu.memory_space<vmem>>, %arg5: memref<32x16xbf16, #tpu.memory_space<vmem>>, %arg6: memref<1x16xf32, #tpu.memory_space<vmem>>, %arg7: memref<16x32xbf16, #tpu.memory_space<vmem>>, %arg8: memref<16x256xf32, #tpu.memory_space<vmem>>, %arg9: memref<16x256xf32, #tpu.memory_space<vmem>>) attributes {dimension_semantics = [#tpu.dimension_semantics<parallel>], iteration_bounds = array<i64: 1>, scalar_prefetch = 0 : i64, scratch_operands = 0 : i64, tpu.core_type = #tpu.core_type<tc>, window_params = [{transform_indices = @transform_0, window_bounds = array<i64: 16, 32>}, {pipeline_mode = #tpu.pipeline_mode<synchronous>, transform_indices = @transform_1, window_bounds = array<i64: 1, 32>}, {pipeline_mode = #tpu.pipeline_mode<synchronous>, transform_indices = @transform_2, window_bounds = array<i64: 1, 32>}, {pipeline_mode = #tpu.pipeline_mode<synchronous>, transform_indices = @transform_3, window_bounds = array<i64: 32, 256>}, {pipeline_mode = #tpu.pipeline_mode<synchronous>, transform_indices = @transform_4, window_bounds = array<i64: 32, 16>}, {pipeline_mode = #tpu.pipeline_mode<synchronous>, transform_indices = @transform_5, window_bounds = array<i64: 1, 16>}, {pipeline_mode = #tpu.pipeline_mode<synchronous>, transform_indices = @transform_6, window_bounds = array<i64: 16, 32>}, {transform_indices = @transform_7, window_bounds = array<i64: 16, 256>}, {transform_indices = @transform_8, window_bounds = array<i64: 16, 256>}]} {
    %c0 = arith.constant 0 : index
    %c0_0 = arith.constant 0 : index
    %0 = vector.load %arg1[%c0, %c0_0] : memref<16x32xf32, #tpu.memory_space<vmem>>, vector<16x32xf32>
    %c0_1 = arith.constant 0 : index
    %c0_2 = arith.constant 0 : index
    %1 = vector.load %arg2[%c0_1, %c0_2] : memref<1x32xf32, #tpu.memory_space<vmem>>, vector<1x32xf32>
    %c0_3 = arith.constant 0 : index
    %c0_4 = arith.constant 0 : index
    %2 = vector.load %arg3[%c0_3, %c0_4] : memref<1x32xf32, #tpu.memory_space<vmem>>, vector<1x32xf32>
    %cst = arith.constant dense<0.000000e+00> : vector<16xf32>
    %3 = vector.multi_reduction <add>, %0, %cst [1] : vector<16x32xf32> to vector<16xf32>
    %4 = vector.shape_cast %3 : vector<16xf32> to vector<16x1xf32>
    %cst_5 = arith.constant 3.200000e+01 : f32
    %5 = vector.broadcast %cst_5 : f32 to vector<16x1xf32>
    %6 = arith.divf %4, %5 : vector<16x1xf32>
    %7 = vector.broadcast %6 : vector<16x1xf32> to vector<16x32xf32>
    %8 = arith.subf %0, %7 : vector<16x32xf32>
    %9 = arith.mulf %8, %8 : vector<16x32xf32>
    %cst_6 = arith.constant dense<0.000000e+00> : vector<16xf32>
    %10 = vector.multi_reduction <add>, %9, %cst_6 [1] : vector<16x32xf32> to vector<16xf32>
    %11 = vector.shape_cast %10 : vector<16xf32> to vector<16x1xf32>
    %cst_7 = arith.constant 3.200000e+01 : f32
    %12 = vector.broadcast %cst_7 : f32 to vector<16x1xf32>
    %13 = arith.divf %11, %12 : vector<16x1xf32>
    %cst_8 = arith.constant 9.99999996E-13 : f32
    %14 = vector.broadcast %cst_8 : f32 to vector<16x1xf32>
    %15 = arith.addf %13, %14 : vector<16x1xf32>
    %16 = math.rsqrt %15 : vector<16x1xf32>
    %17 = vector.broadcast %16 : vector<16x1xf32> to vector<16x32xf32>
    %18 = arith.mulf %8, %17 : vector<16x32xf32>
    %19 = vector.broadcast %1 : vector<1x32xf32> to vector<16x32xf32>
    %20 = arith.mulf %19, %18 : vector<16x32xf32>
    %21 = vector.broadcast %2 : vector<1x32xf32> to vector<16x32xf32>
    %22 = arith.addf %20, %21 : vector<16x32xf32>
    %23 = arith.truncf %22 : vector<16x32xf32> to vector<16x32xbf16>
    %c0_9 = arith.constant 0 : index
    %c0_10 = arith.constant 0 : index
    %24 = vector.load %arg4[%c0_9, %c0_10] : memref<32x256xbf16, #tpu.memory_space<vmem>>, vector<32x256xbf16>
    %cst_11 = arith.constant dense<0.000000e+00> : vector<16x256xf32>
    %25 = tpu.matmul %23, %24, %cst_11 {dimension_numbers = #tpu.dot_dimension_numbers<[1], [0], [0], [1], [0, 0, 1, 1], [], []>} : vector<16x32xbf16>, vector<32x256xbf16>, vector<16x256xf32> -> vector<16x256xf32>
    %c0_12 = arith.constant 0 : index
    %c0_13 = arith.constant 0 : index
    %26 = vector.load %arg8[%c0_12, %c0_13] : memref<16x256xf32, #tpu.memory_space<vmem>>, vector<16x256xf32>
    tpu.vector_store %arg8[%c0_12, %c0_13], %25 {strides = array<i32>} : memref<16x256xf32, #tpu.memory_space<vmem>>, vector<16x256xf32>,
    %c0_14 = arith.constant 0 : index
    %c0_15 = arith.constant 0 : index
    %27 = vector.load %arg5[%c0_14, %c0_15] : memref<32x16xbf16, #tpu.memory_space<vmem>>, vector<32x16xbf16>
    %cst_16 = arith.constant dense<0.000000e+00> : vector<16x16xf32>
    %28 = tpu.matmul %23, %27, %cst_16 {dimension_numbers = #tpu.dot_dimension_numbers<[1], [0], [0], [1], [0, 0, 1, 1], [], []>} : vector<16x32xbf16>, vector<32x16xbf16>, vector<16x16xf32> -> vector<16x16xf32>
    %c0_17 = arith.constant 0 : index
    %c0_18 = arith.constant 0 : index
    %29 = vector.load %arg6[%c0_17, %c0_18] : memref<1x16xf32, #tpu.memory_space<vmem>>, vector<1x16xf32>
    %30 = vector.broadcast %29 : vector<1x16xf32> to vector<16x16xf32>
    %31 = arith.addf %28, %30 : vector<16x16xf32>
    %c0_19 = arith.constant 0 : index
    %c0_20 = arith.constant 0 : index
    %32 = vector.load %arg7[%c0_19, %c0_20] : memref<16x32xbf16, #tpu.memory_space<vmem>>, vector<16x32xbf16>
    %c0_21 = arith.constant 0 : index
    %c0_22 = arith.constant 0 : index
    %33 = vector.load %arg4[%c0_21, %c0_22] : memref<32x256xbf16, #tpu.memory_space<vmem>>, vector<32x256xbf16>
    %cst_23 = arith.constant dense<0.000000e+00> : vector<16x256xf32>
    %34 = tpu.matmul %32, %33, %cst_23 {dimension_numbers = #tpu.dot_dimension_numbers<[1], [0], [0], [1], [0, 0, 1, 1], [], []>} : vector<16x32xbf16>, vector<32x256xbf16>, vector<16x256xf32> -> vector<16x256xf32>
    %35 = arith.truncf %31 : vector<16x16xf32> to vector<16x16xbf16>
    %36 = arith.truncf %34 : vector<16x256xf32> to vector<16x256xbf16>
    %cst_24 = arith.constant dense<0.000000e+00> : vector<16x256xf32>
    %37 = tpu.matmul %35, %36, %cst_24 {dimension_numbers = #tpu.dot_dimension_numbers<[1], [0], [0], [1], [0, 0, 1, 1], [], []>} : vector<16x16xbf16>, vector<16x256xbf16>, vector<16x256xf32> -> vector<16x256xf32>
    %c0_25 = arith.constant 0 : index
    %c0_26 = arith.constant 0 : index
    %38 = vector.load %arg9[%c0_25, %c0_26] : memref<16x256xf32, #tpu.memory_space<vmem>>, vector<16x256xf32>
    tpu.vector_store %arg9[%c0_25, %c0_26], %37 {strides = array<i32>} : memref<16x256xf32, #tpu.memory_space<vmem>>, vector<16x256xf32>,
    return
  }
  func.func @transform_0(%arg0: i32) -> (i32, i32) {
    %c0_i32 = arith.constant 0 : i32
    %c0_i32_0 = arith.constant 0 : i32
    return %arg0, %c0_i32 : i32, i32
  }
  func.func @transform_1(%arg0: i32) -> (i32, i32) {
    %c0_i32 = arith.constant 0 : i32
    %c0_i32_0 = arith.constant 0 : i32
    %c0_i32_1 = arith.constant 0 : i32
    return %c0_i32, %c0_i32_0 : i32, i32
  }
  func.func @transform_2(%arg0: i32) -> (i32, i32) {
    %c0_i32 = arith.constant 0 : i32
    %c0_i32_0 = arith.constant 0 : i32
    %c0_i32_1 = arith.constant 0 : i32
    return %c0_i32, %c0_i32_0 : i32, i32
  }
  func.func @transform_3(%arg0: i32) -> (i32, i32) {
    %c0_i32 = arith.constant 0 : i32
    %c0_i32_0 = arith.constant 0 : i32
    %c0_i32_1 = arith.constant 0 : i32
    return %c0_i32, %c0_i32_0 : i32, i32
  }
  func.func @transform_4(%arg0: i32) -> (i32, i32) {
    %c0_i32 = arith.constant 0 : i32
    %c0_i32_0 = arith.constant 0 : i32
    %c0_i32_1 = arith.constant 0 : i32
    return %c0_i32, %c0_i32_0 : i32, i32
  }
  func.func @transform_5(%arg0: i32) -> (i32, i32) {
    %c0_i32 = arith.constant 0 : i32
    %c0_i32_0 = arith.constant 0 : i32
    %c0_i32_1 = arith.constant 0 : i32
    return %c0_i32, %c0_i32_0 : i32, i32
  }
  func.func @transform_6(%arg0: i32) -> (i32, i32) {
    %c0_i32 = arith.constant 0 : i32
    %c0_i32_0 = arith.constant 0 : i32
    %c0_i32_1 = arith.constant 0 : i32
    return %c0_i32, %c0_i32_0 : i32, i32
  }
  func.func @transform_7(%arg0: i32) -> (i32, i32) {
    %c0_i32 = arith.constant 0 : i32
    %c0_i32_0 = arith.constant 0 : i32
    return %arg0, %c0_i32 : i32, i32
  }
  func.func @transform_8(%arg0: i32) -> (i32, i32) {
    %c0_i32 = arith.constant 0 : i32
    %c0_i32_0 = arith.constant 0 : i32
    return %arg0, %c0_i32 : i32, i32
  }
}

</mosaic_0001>

<llo_original>
// kernel: ducdiff_forward.2
$region0: #{ducdiff_forward.2}
  #allocation0 [shape = 'u32[]', space=smem, size = 0x4, offset = 0x4, fixed_abs, tag = 'smem constant byte address 0x4 - core index']
  #allocation1 [shape = 'u32[144,128]{1,0:T(1,128)}', space=vmem, size = 0x12000, scoped, tag = 'internal scratch']
  %s0 = inlined_call_operand.vmem [shape: f32[16,32], index: 0, kind: input, shape index: {}]
  %s1 = inlined_call_operand.vmem [shape: f32[1,32], index: 1, kind: input, shape index: {}]
  %s2 = inlined_call_operand.vmem [shape: f32[1,32], index: 2, kind: input, shape index: {}]
  %s3 = inlined_call_operand.vmem [shape: bf16[32,256], index: 3, kind: input, shape index: {}]
  %s4 = inlined_call_operand.vmem [shape: bf16[32,16], index: 4, kind: input, shape index: {}]
  %s5 = inlined_call_operand.vmem [shape: f32[1,16], index: 5, kind: input, shape index: {}]
  %s6 = inlined_call_operand.vmem [shape: bf16[16,32], index: 6, kind: input, shape index: {}]
  %s7 = inlined_call_operand.vmem [shape: s32[16,9], index: 7, kind: input, shape index: {}]
  %s8 = inlined_call_operand.hbm [shape: f32[16,256], index: 8, kind: output, shape index: {0}]
  %s9 = inlined_call_operand.hbm [shape: f32[16,256], index: 9, kind: output, shape index: {1}]
  %s10 = inlined_call_operand.hbm [shape: f32[16,256], index: 10, kind: output, shape index: {2}]
  %11 = xla_tuple %s8, %s9, %s10
  %s12 = sld [smem:[#allocation0]]
  $region58: #{ducdiff_forward.2} parent=0
    _
  %s14 = ssub.s32 1, %s12
  %s15 = scalar_select 0, %s14, %s12
  $region1: #{ducdiff_forward.2} parent=0
    #allocation2 [shape = 'u8[16384]{0}', space=vmem, size = 0x4000, scoped, tag = 'output window, operand 0, single buffered']
    #allocation3 [shape = 's32[1]{0}', space=sflag, size = 0x4, scoped, tag = 'scoped memory for ducdiff_forward.2']
    #allocation4 [shape = 'u8[16384]{0}', space=vmem, size = 0x4000, scoped, tag = 'output window, operand 1, single buffered']
    #allocation5 [shape = 's32[1]{0}', space=sflag, size = 0x4, scoped, tag = 'scoped memory for ducdiff_forward.2']
    #allocation6 [shape = 'u8[16384]{0}', space=vmem, size = 0x4000, scoped, tag = 'output window, operand 2, single buffered']
    %16 = vsyncpa [#allocation3], 0
    %17 = vsyncpa [#allocation5], 0
    // Predicated region
    $region2: #{ducdiff_forward.2} parent=1 // pred_check
      _
    $region3: #{ducdiff_forward.2} parent=1 // pred_check_branch
      %19 = sbr.rel (0) target = $region5
    $region4: #{ducdiff_forward.2} parent=1 // pred_region
      _
    $region5: #{ducdiff_forward.2} parent=1 // pred_fallthru
      _
    // Predicated region
    $region6: #{ducdiff_forward.2} parent=1 // pred_check
      _
    $region7: #{ducdiff_forward.2} parent=1 // pred_check_branch
      %21 = sbr.rel (0) target = $region9
    $region8: #{ducdiff_forward.2} parent=1 // pred_region
      _
    $region9: #{ducdiff_forward.2} parent=1 // pred_fallthru
      _
    // Predicated region
    $region10: #{ducdiff_forward.2} parent=1 // pred_check
      _
    $region11: #{ducdiff_forward.2} parent=1 // pred_check_branch
      %23 = sbr.rel (0) target = $region13
    $region12: #{ducdiff_forward.2} parent=1 // pred_region
      _
    $region13: #{ducdiff_forward.2} parent=1 // pred_fallthru
      _
    // Predicated region
    $region14: #{ducdiff_forward.2} parent=1 // pred_check
      _
    $region15: #{ducdiff_forward.2} parent=1 // pred_check_branch
      %25 = sbr.rel (0) target = $region17
    $region16: #{ducdiff_forward.2} parent=1 // pred_region
      _
    $region17: #{ducdiff_forward.2} parent=1 // pred_fallthru
      _
    // Predicated region
    $region18: #{ducdiff_forward.2} parent=1 // pred_check
      _
    $region19: #{ducdiff_forward.2} parent=1 // pred_check_branch
      %27 = sbr.rel (0) target = $region21
    $region20: #{ducdiff_forward.2} parent=1 // pred_region
      _
    $region21: #{ducdiff_forward.2} parent=1 // pred_fallthru
      _
    // Predicated region
    $region22: #{ducdiff_forward.2} parent=1 // pred_check
      _
    $region23: #{ducdiff_forward.2} parent=1 // pred_check_branch
      %29 = sbr.rel (0) target = $region25
    $region24: #{ducdiff_forward.2} parent=1 // pred_region
      _
    $region25: #{ducdiff_forward.2} parent=1 // pred_fallthru
      _
    // Predicated region
    $region26: #{ducdiff_forward.2} parent=1 // pred_check
      _
    $region27: #{ducdiff_forward.2} parent=1 // pred_check_branch
      %31 = sbr.rel (0) target = $region29
    $region28: #{ducdiff_forward.2} parent=1 // pred_region
      _
    $region29: #{ducdiff_forward.2} parent=1 // pred_fallthru
      _
    // Predicated region
    $region30: #{ducdiff_forward.2} parent=1 // pred_check
      _
    $region31: #{ducdiff_forward.2} parent=1 // pred_check_branch
      %33 = sbr.rel (0) target = $region33
    $region32: #{ducdiff_forward.2} parent=1 // pred_region
      _
    $region33: #{ducdiff_forward.2} parent=1 // pred_fallthru
      _
    %v35 = vld [vmem:[%s0] sm:$0xff]
    %v36 = vld [vmem:[%s0 + $0x8] sm:$0xff]
    %v37 = vld [vmem:[%s1] sm:$0x1]
    %v38 = vld [vmem:[%s2] sm:$0x1]
    %vm39 = vcmask 261120
    %v40 = vsel %vm39, %v35, 0.0
    %41 = vadd.xlane.f32.xlu0 %v40
    %v42 = vpop.xlane.xlu0 %41
    %v43 = vsel %vm39, %v36, 0.0
    %44 = vadd.xlane.f32.xlu0 %v43
    %v45 = vpop.xlane.xlu0 %44
    %v46 = vrcp.pop 32.0
    %v47 = vmul.f32 %v42, %v46
    %v48 = vmul.f32 %v45, %v46
    %v49 = vsub.f32 %v35, %v47
    %v50 = vsub.f32 %v36, %v48
    %v51 = vmul.f32 %v49, %v49
    %v52 = vmul.f32 %v50, %v50
    %v53 = vsel %vm39, %v51, 0.0
    %54 = vadd.xlane.f32.xlu0 %v53
    %v55 = vpop.xlane.xlu0 %54
    %v56 = vsel %vm39, %v52, 0.0
    %57 = vadd.xlane.f32.xlu0 %v56
    %v58 = vpop.xlane.xlu0 %57
    %v59 = vmul.f32 %v55, %v46
    %v60 = vmul.f32 %v58, %v46
    %v61 = vadd.f32 %v59, 1e-12
    %v62 = vadd.f32 %v60, 1e-12
    %v63 = vrsqrt.pop %v61
    %v64 = vrsqrt.pop %v62
    %v65 = vmul.f32 %v49, %v63
    %v66 = vmul.f32 %v50, %v64
    %v68 = vlaneseq
    %v69 = vshrl.u32 %v68, 7
    %v70 = vsub.s32 0, %v69
    %v71 = vrot.slane %v37, %v70
    %v73 = vmul.f32 %v71, %v65
    %v74 = vmul.f32 %v71, %v66
    %v76 = vlaneseq
    %v77 = vshrl.u32 %v76, 7
    %v78 = vsub.s32 0, %v77
    %v79 = vrot.slane %v38, %v78
    %v81 = vadd.f32 %v73, %v79
    %v82 = vadd.f32 %v74, %v79
    %v83 = vpack.c.bf16 %v82, %v81
    %v84 = vld [vmem:[%s3] sm:$0xff]
    %v85 = vld [vmem:[%s3 + $0x8] sm:$0xff]
    %v86 = vld [vmem:[%s3 + $0x10] sm:$0xff]
    %v87 = vld [vmem:[%s3 + $0x18] sm:$0xff]
    %v92 = vunpack.c.l.b16 %v84
    %v93 = vunpack.c.h.b16 %v84
    %v94 = vunpack.c.l.b16 %v85
    %v95 = vunpack.c.h.b16 %v85
    %v96 = vunpack.c.l.b16 %v86
    %v97 = vunpack.c.h.b16 %v86
    %v98 = vunpack.c.l.b16 %v87
    %v99 = vunpack.c.h.b16 %v87
    %v100 = vpack.c.b16 %v94, %v92
    %v101 = vpack.c.b16 %v95, %v93
    %v102 = vpack.c.b16 %v98, %v96
    %v103 = vpack.c.b16 %v99, %v97
    %v109 = vsel %vm39, %v83, 0
    %111 = vmatprep.subr.bf16.mxu0 0
    %112 = vmatpush1.bf16.msra.mxu0 0
    %113 = vmatprep.subr.bf16.mxu0 0
    %114 = vmatpush1.bf16.msra.mxu0 0
    %115 = vmatprep.subr.bf16.mxu0 0
    %116 = vmatpush1.bf16.msra.mxu0 0
    %117 = vmatprep.subr.bf16.mxu0 0
    %118 = vmatpush1.bf16.msra.mxu0 0
    %119 = vmatprep.subr.bf16.mxu0 0
    %120 = vmatpush1.bf16.msra.mxu0 0
    %121 = vmatprep.subr.bf16.mxu0 0
    %122 = vmatpush1.bf16.msra.mxu0 0
    %123 = vmatprep.subr.bf16.mxu0 %v103
    %124 = vmatpush1.bf16.msra.mxu0 %v102
    %125 = vmatprep.subr.bf16.mxu0 %v101
    %126 = vmatpush1.bf16.msra.mxu0 %v100
    %127 = vmatprep.subr.bf16.mxu0 0
    %128 = vmatpush2.bf16.msra.mxu0 0
    %129 = vmatprep.subr.bf16.mxu0 0
    %130 = vmatpush2.bf16.msra.mxu0 0
    %131 = vmatprep.subr.bf16.mxu0 0
    %132 = vmatpush2.bf16.msra.mxu0 0
    %133 = vmatprep.subr.bf16.mxu0 0
    %134 = vmatpush2.bf16.msra.mxu0 0
    %135 = vmatprep.subr.bf16.mxu0 0
    %136 = vmatpush2.bf16.msra.mxu0 0
    %137 = vmatprep.subr.bf16.mxu0 0
    %138 = vmatpush2.bf16.msra.mxu0 0
    %139 = vmatprep.subr.bf16.mxu0 0
    %140 = vmatpush2.bf16.msra.mxu0 0
    %141 = vmatprep.subr.bf16.mxu0 0
    %142 = vmatpush2.bf16.msra.mxu0 0
    %143 = vmatprep.mubr.bf16.mxu0 0
    %144 = vmatmul.mubr.bf16.gmra.mxu0 %v109
    %v145 = vpop.f32.mrf.mxu0
    %v146 = vadd.f32 0.0, %v145
    %v147 = vpop.f32.mrf.mxu0
    %v148 = vadd.f32 0.0, %v147
    %v149 = vpop.f32.mrf.mxu0
    %v150 = vadd.f32 0.0, %v149
    %v151 = vpop.f32.mrf.mxu0
    %v152 = vadd.f32 0.0, %v151
    %153 = vdwg.mxu0
    %154 = vst [vmem:[#allocation2] sm:$0xff] %v146
    %155 = vst [vmem:[#allocation2 + $0x8] sm:$0xff] %v148
    %156 = vst [vmem:[#allocation2 + $0x10] sm:$0xff] %v150
    %157 = vst [vmem:[#allocation2 + $0x18] sm:$0xff] %v152
    %v158 = vlaneseq
    %v159 = vand.u32 %v158, 127
    %v160 = vadd.s32 %v159, 128
    %v161 = vld [vmem:[%s7] sm:$0xff]
    %v162 = vld [vmem:[%s7 + $0x8] sm:$0xff]
    %163 = vset.pattern.permute.xlu0 0
    %164 = vperm.xlu0 %163, %v161
    %v165 = vpop.permute.xlu0 %164
    %166 = vset.pattern.permute.xlu0 0
    %167 = vperm.xlu0 %166, %v162
    %v168 = vpop.permute.xlu0 %167
    %vm169 = vcmp.eq.s32.totalorder %v165, %v159
    %vm170 = vcmp.eq.s32.totalorder %v165, %v160
    %vm171 = vcmp.eq.s32.totalorder %v168, %v159
    %vm172 = vcmp.eq.s32.totalorder %v168, %v160
    %173 = vset.pattern.permute.xlu0 1
    %174 = vperm.xlu0 %173, %v161
    %v175 = vpop.permute.xlu0 %174
    %176 = vset.pattern.permute.xlu0 1
    %177 = vperm.xlu0 %176, %v162
    %v178 = vpop.permute.xlu0 %177
    %vm179 = vcmp.eq.s32.totalorder %v175, %v159
    %vm180 = vcmp.eq.s32.totalorder %v175, %v160
    %vm181 = vcmp.eq.s32.totalorder %v178, %v159
    %vm182 = vcmp.eq.s32.totalorder %v178, %v160
    %183 = vset.pattern.permute.xlu0 2
    %184 = vperm.xlu0 %183, %v161
    %v185 = vpop.permute.xlu0 %184
    %186 = vset.pattern.permute.xlu0 2
    %187 = vperm.xlu0 %186, %v162
    %v188 = vpop.permute.xlu0 %187
    %vm189 = vcmp.eq.s32.totalorder %v185, %v159
    %vm190 = vcmp.eq.s32.totalorder %v185, %v160
    %vm191 = vcmp.eq.s32.totalorder %v188, %v159
    %vm192 = vcmp.eq.s32.totalorder %v188, %v160
    %193 = vset.pattern.permute.xlu0 3
    %194 = vperm.xlu0 %193, %v161
    %v195 = vpop.permute.xlu0 %194
    %196 = vset.pattern.permute.xlu0 3
    %197 = vperm.xlu0 %196, %v162
    %v198 = vpop.permute.xlu0 %197
    %vm199 = vcmp.eq.s32.totalorder %v195, %v159
    %vm200 = vcmp.eq.s32.totalorder %v195, %v160
    %vm201 = vcmp.eq.s32.totalorder %v198, %v159
    %vm202 = vcmp.eq.s32.totalorder %v198, %v160
    %203 = vset.pattern.permute.xlu0 4
    %204 = vperm.xlu0 %203, %v161
    %v205 = vpop.permute.xlu0 %204
    %206 = vset.pattern.permute.xlu0 4
    %207 = vperm.xlu0 %206, %v162
    %v208 = vpop.permute.xlu0 %207
    %vm209 = vcmp.eq.s32.totalorder %v205, %v159
    %vm210 = vcmp.eq.s32.totalorder %v205, %v160
    %vm211 = vcmp.eq.s32.totalorder %v208, %v159
    %vm212 = vcmp.eq.s32.totalorder %v208, %v160
    %213 = vset.pattern.permute.xlu0 5
    %214 = vperm.xlu0 %213, %v161
    %v215 = vpop.permute.xlu0 %214
    %216 = vset.pattern.permute.xlu0 5
    %217 = vperm.xlu0 %216, %v162
    %v218 = vpop.permute.xlu0 %217
    %vm219 = vcmp.eq.s32.totalorder %v215, %v159
    %vm220 = vcmp.eq.s32.totalorder %v215, %v160
    %vm221 = vcmp.eq.s32.totalorder %v218, %v159
    %vm222 = vcmp.eq.s32.totalorder %v218, %v160
    %223 = vset.pattern.permute.xlu0 6
    %224 = vperm.xlu0 %223, %v161
    %v225 = vpop.permute.xlu0 %224
    %226 = vset.pattern.permute.xlu0 6
    %227 = vperm.xlu0 %226, %v162
    %v228 = vpop.permute.xlu0 %227
    %vm229 = vcmp.eq.s32.totalorder %v225, %v159
    %vm230 = vcmp.eq.s32.totalorder %v225, %v160
    %vm231 = vcmp.eq.s32.totalorder %v228, %v159
    %vm232 = vcmp.eq.s32.totalorder %v228, %v160
    %233 = vset.pattern.permute.xlu0 7
    %234 = vperm.xlu0 %233, %v161
    %v235 = vpop.permute.xlu0 %234
    %236 = vset.pattern.permute.xlu0 7
    %237 = vperm.xlu0 %236, %v162
    %v238 = vpop.permute.xlu0 %237
    %vm239 = vcmp.eq.s32.totalorder %v235, %v159
    %vm240 = vcmp.eq.s32.totalorder %v235, %v160
    %vm241 = vcmp.eq.s32.totalorder %v238, %v159
    %vm242 = vcmp.eq.s32.totalorder %v238, %v160
    %243 = vset.pattern.permute.xlu0 8
    %244 = vperm.xlu0 %243, %v161
    %v245 = vpop.permute.xlu0 %244
    %246 = vset.pattern.permute.xlu0 8
    %247 = vperm.xlu0 %246, %v162
    %v248 = vpop.permute.xlu0 %247
    %vm249 = vcmp.eq.s32.totalorder %v245, %v159
    %vm250 = vcmp.eq.s32.totalorder %v245, %v160
    %vm251 = vcmp.eq.s32.totalorder %v248, %v159
    %vm252 = vcmp.eq.s32.totalorder %v248, %v160
    %vm253 = vmor %vm169, %vm179
    %vm254 = vmor %vm170, %vm180
    %vm255 = vmor %vm171, %vm181
    %vm256 = vmor %vm172, %vm182
    %vm257 = vmor %vm189, %vm199
    %vm258 = vmor %vm190, %vm200
    %vm259 = vmor %vm191, %vm201
    %vm260 = vmor %vm192, %vm202
    %vm261 = vmor %vm209, %vm219
    %vm262 = vmor %vm210, %vm220
    %vm263 = vmor %vm211, %vm221
    %vm264 = vmor %vm212, %vm222
    %vm265 = vmor %vm229, %vm239
    %vm266 = vmor %vm230, %vm240
    %vm267 = vmor %vm231, %vm241
    %vm268 = vmor %vm232, %vm242
    %vm269 = vmor %vm253, %vm257
    %vm270 = vmor %vm254, %vm258
    %vm271 = vmor %vm255, %vm259
    %vm272 = vmor %vm256, %vm260
    %vm273 = vmor %vm261, %vm265
    %vm274 = vmor %vm262, %vm266
    %vm275 = vmor %vm263, %vm267
    %vm276 = vmor %vm264, %vm268
    %vm277 = vmor %vm269, %vm273
    %vm278 = vmor %vm270, %vm274
    %vm279 = vmor %vm271, %vm275
    %vm280 = vmor %vm272, %vm276
    %vm281 = vmor %vm277, %vm249
    %vm282 = vmor %vm278, %vm250
    %vm283 = vmor %vm279, %vm251
    %vm284 = vmor %vm280, %vm252
    %v285 = vsel %vm281, -1000.0, 0.0
    %v286 = vsel %vm282, -1000.0, 0.0
    %v287 = vsel %vm283, -1000.0, 0.0
    %v288 = vsel %vm284, -1000.0, 0.0
    %v289 = vadd.f32 %v146, %v285
    %v290 = vadd.f32 %v148, %v286
    %v291 = vadd.f32 %v150, %v287
    %v292 = vadd.f32 %v152, %v288
    %293 = vst [vmem:[#allocation4] sm:$0xff] %v289
    %294 = vst [vmem:[#allocation4 + $0x8] sm:$0xff] %v290
    %295 = vst [vmem:[#allocation4 + $0x10] sm:$0xff] %v291
    %296 = vst [vmem:[#allocation4 + $0x18] sm:$0xff] %v292
    %v297 = vld [vmem:[%s4] sm:$0xf]
    %v298 = vld [vmem:[%s4 + $0x4] sm:$0xf]
    %v299 = vld [vmem:[%s4 + $0x8] sm:$0xf]
    %v300 = vld [vmem:[%s4 + $0xc] sm:$0xf]
    %v301 = vld [vmem:[%s5] sm:$0x1]
    %v303 = vlaneseq
    %v304 = vshrl.u32 %v303, 7
    %v305 = vsub.s32 0, %v304
    %v306 = vrot.slane %v301, %v305
    %v312 = vunpack.c.l.b16 %v297
    %v313 = vunpack.c.l.b16 %v298
    %v314 = vunpack.c.l.b16 %v299
    %v315 = vunpack.c.l.b16 %v300
    %v316 = vpack.c.b16 %v313, %v312
    %v317 = vpack.c.b16 %v315, %v314
    %320 = vmatprep.subr.bf16.mxu0 0
    %321 = vmatpush1.bf16.msra.mxu0 0
    %322 = vmatprep.subr.bf16.mxu0 0
    %323 = vmatpush1.bf16.msra.mxu0 0
    %324 = vmatprep.subr.bf16.mxu0 0
    %325 = vmatpush1.bf16.msra.mxu0 0
    %326 = vmatprep.subr.bf16.mxu0 0
    %327 = vmatpush1.bf16.msra.mxu0 0
    %328 = vmatprep.subr.bf16.mxu0 0
    %329 = vmatpush1.bf16.msra.mxu0 0
    %330 = vmatprep.subr.bf16.mxu0 0
    %331 = vmatpush1.bf16.msra.mxu0 0
    %332 = vmatprep.subr.bf16.mxu0 0
    %333 = vmatpush1.bf16.msra.mxu0 %v317
    %334 = vmatprep.subr.bf16.mxu0 0
    %335 = vmatpush1.bf16.msra.mxu0 %v316
    %336 = vmatprep.subr.bf16.mxu0 0
    %337 = vmatpush2.bf16.msra.mxu0 0
    %338 = vmatprep.subr.bf16.mxu0 0
    %339 = vmatpush2.bf16.msra.mxu0 0
    %340 = vmatprep.subr.bf16.mxu0 0
    %341 = vmatpush2.bf16.msra.mxu0 0
    %342 = vmatprep.subr.bf16.mxu0 0
    %343 = vmatpush2.bf16.msra.mxu0 0
    %344 = vmatprep.subr.bf16.mxu0 0
    %345 = vmatpush2.bf16.msra.mxu0 0
    %346 = vmatprep.subr.bf16.mxu0 0
    %347 = vmatpush2.bf16.msra.mxu0 0
    %348 = vmatprep.subr.bf16.mxu0 0
    %349 = vmatpush2.bf16.msra.mxu0 0
    %350 = vmatprep.subr.bf16.mxu0 0
    %351 = vmatpush2.bf16.msra.mxu0 0
    %352 = vmatprep.mubr.bf16.mxu0 0
    %353 = vmatmul.mubr.bf16.gmra.mxu0 %v109
    %v354 = vpop.f32.mrf.mxu0
    %v355 = vadd.f32 %v306, %v354
    %v356 = vpop.f32.mrf.mxu0
    %v357 = vpop.f32.mrf.mxu0
    %v358 = vadd.f32 %v306, %v357
    %v359 = vpop.f32.mrf.mxu0
    %360 = vdwg.mxu0
    %v361 = vld [vmem:[%s6] sm:$0xf]
    %v362 = vld [vmem:[%s6 + $0x4] sm:$0xf]
    %v363 = vld [vmem:[%s3] sm:$0xff]
    %v364 = vld [vmem:[%s3 + $0x8] sm:$0xff]
    %v365 = vld [vmem:[%s3 + $0x10] sm:$0xff]
    %v366 = vld [vmem:[%s3 + $0x18] sm:$0xff]
    %v369 = vunpack.c.l.b16 %v361
    %v370 = vunpack.c.l.b16 %v362
    %v371 = vpack.c.b16 %v370, %v369
    %v376 = vunpack.c.l.b16 %v363
    %v377 = vunpack.c.h.b16 %v363
    %v378 = vunpack.c.l.b16 %v364
    %v379 = vunpack.c.h.b16 %v364
    %v380 = vunpack.c.l.b16 %v365
    %v381 = vunpack.c.h.b16 %v365
    %v382 = vunpack.c.l.b16 %v366
    %v383 = vunpack.c.h.b16 %v366
    %v384 = vpack.c.b16 %v378, %v376
    %v385 = vpack.c.b16 %v379, %v377
    %v386 = vpack.c.b16 %v382, %v380
    %v387 = vpack.c.b16 %v383, %v381
    %v393 = vsel %vm39, %v371, 0
    %395 = vmatprep.subr.bf16.mxu0 0
    %396 = vmatpush1.bf16.msra.mxu0 0
    %397 = vmatprep.subr.bf16.mxu0 0
    %398 = vmatpush1.bf16.msra.mxu0 0
    %399 = vmatprep.subr.bf16.mxu0 0
    %400 = vmatpush1.bf16.msra.mxu0 0
    %401 = vmatprep.subr.bf16.mxu0 0
    %402 = vmatpush1.bf16.msra.mxu0 0
    %403 = vmatprep.subr.bf16.mxu0 0
    %404 = vmatpush1.bf16.msra.mxu0 0
    %405 = vmatprep.subr.bf16.mxu0 0
    %406 = vmatpush1.bf16.msra.mxu0 0
    %407 = vmatprep.subr.bf16.mxu0 %v387
    %408 = vmatpush1.bf16.msra.mxu0 %v386
    %409 = vmatprep.subr.bf16.mxu0 %v385
    %410 = vmatpush1.bf16.msra.mxu0 %v384
    %411 = vmatprep.subr.bf16.mxu0 0
    %412 = vmatpush2.bf16.msra.mxu0 0
    %413 = vmatprep.subr.bf16.mxu0 0
    %414 = vmatpush2.bf16.msra.mxu0 0
    %415 = vmatprep.subr.bf16.mxu0 0
    %416 = vmatpush2.bf16.msra.mxu0 0
    %417 = vmatprep.subr.bf16.mxu0 0
    %418 = vmatpush2.bf16.msra.mxu0 0
    %419 = vmatprep.subr.bf16.mxu0 0
    %420 = vmatpush2.bf16.msra.mxu0 0
    %421 = vmatprep.subr.bf16.mxu0 0
    %422 = vmatpush2.bf16.msra.mxu0 0
    %423 = vmatprep.subr.bf16.mxu0 0
    %424 = vmatpush2.bf16.msra.mxu0 0
    %425 = vmatprep.subr.bf16.mxu0 0
    %426 = vmatpush2.bf16.msra.mxu0 0
    %427 = vmatprep.mubr.bf16.mxu0 0
    %428 = vmatmul.mubr.bf16.gmra.mxu0 %v393
    %v429 = vpop.f32.mrf.mxu0
    %v430 = vadd.f32 0.0, %v429
    %v431 = vpop.f32.mrf.mxu0
    %v432 = vadd.f32 0.0, %v431
    %v433 = vpop.f32.mrf.mxu0
    %v434 = vadd.f32 0.0, %v433
    %v435 = vpop.f32.mrf.mxu0
    %v436 = vadd.f32 0.0, %v435
    %437 = vdwg.mxu0
    %v438 = vpack.c.bf16 %v358, %v355
    %v439 = vpack.c.bf16 %v434, %v430
    %v440 = vpack.c.bf16 %v436, %v432
    %vm441 = vcmask 130048
    %v443 = vsel %vm441, %v438, 0
    %445 = vmatprep.subr.bf16.mxu0 0
    %446 = vmatpush1.bf16.msra.mxu0 0
    %447 = vmatprep.subr.bf16.mxu0 0
    %448 = vmatpush1.bf16.msra.mxu0 0
    %449 = vmatprep.subr.bf16.mxu0 0
    %450 = vmatpush1.bf16.msra.mxu0 0
    %451 = vmatprep.subr.bf16.mxu0 0
    %452 = vmatpush1.bf16.msra.mxu0 0
    %453 = vmatprep.subr.bf16.mxu0 0
    %454 = vmatpush1.bf16.msra.mxu0 0
    %455 = vmatprep.subr.bf16.mxu0 0
    %456 = vmatpush1.bf16.msra.mxu0 0
    %457 = vmatprep.subr.bf16.mxu0 0
    %458 = vmatpush1.bf16.msra.mxu0 0
    %459 = vmatprep.subr.bf16.mxu0 %v440
    %460 = vmatpush1.bf16.msra.mxu0 %v439
    %461 = vmatprep.subr.bf16.mxu0 0
    %462 = vmatpush2.bf16.msra.mxu0 0
    %463 = vmatprep.subr.bf16.mxu0 0
    %464 = vmatpush2.bf16.msra.mxu0 0
    %465 = vmatprep.subr.bf16.mxu0 0
    %466 = vmatpush2.bf16.msra.mxu0 0
    %467 = vmatprep.subr.bf16.mxu0 0
    %468 = vmatpush2.bf16.msra.mxu0 0
    %469 = vmatprep.subr.bf16.mxu0 0
    %470 = vmatpush2.bf16.msra.mxu0 0
    %471 = vmatprep.subr.bf16.mxu0 0
    %472 = vmatpush2.bf16.msra.mxu0 0
    %473 = vmatprep.subr.bf16.mxu0 0
    %474 = vmatpush2.bf16.msra.mxu0 0
    %475 = vmatprep.subr.bf16.mxu0 0
    %476 = vmatpush2.bf16.msra.mxu0 0
    %477 = vmatprep.mubr.bf16.mxu0 0
    %478 = vmatmul.mubr.bf16.gmra.mxu0 %v443
    %v479 = vpop.f32.mrf.mxu0
    %v480 = vadd.f32 0.0, %v479
    %v481 = vpop.f32.mrf.mxu0
    %v482 = vadd.f32 0.0, %v481
    %v483 = vpop.f32.mrf.mxu0
    %v484 = vadd.f32 0.0, %v483
    %v485 = vpop.f32.mrf.mxu0
    %v486 = vadd.f32 0.0, %v485
    %487 = vdwg.mxu0
    %488 = vst [vmem:[#allocation6] sm:$0xff] %v480
    %489 = vst [vmem:[#allocation6 + $0x8] sm:$0xff] %v482
    %490 = vst [vmem:[#allocation6 + $0x10] sm:$0xff] %v484
    %491 = vst [vmem:[#allocation6 + $0x18] sm:$0xff] %v486
    // Predicated region
    $region34: #{ducdiff_forward.2} parent=1 // pred_check
      _
    $region35: #{ducdiff_forward.2} parent=1 // pred_check_branch
      %493 = sbr.rel (0) target = $region37
    $region36: #{ducdiff_forward.2} parent=1 // pred_region
      %s495 = ssub.s32 512, 512
      %496 = vsyncadd [#allocation3], %s495
      %s497 = sshll.u32 [#allocation2], 4
      %s498 = int_to_ptr.vmem [resolvable:$true] %s497
      %503 = dma.vmem_to_hbm [thread:$0]  %s498, 512, %s8, [#allocation3], 256, 256, 16
    $region37: #{ducdiff_forward.2} parent=1 // pred_fallthru
      _
    // Predicated region
    $region38: #{ducdiff_forward.2} parent=1 // pred_check
      _
    $region39: #{ducdiff_forward.2} parent=1 // pred_check_branch
      %505 = sbr.rel (0) target = $region41
    $region40: #{ducdiff_forward.2} parent=1 // pred_region
      %s507 = ssub.s32 512, 512
      %508 = vsyncadd [#allocation5], %s507
      %s509 = sshll.u32 [#allocation4], 4
      %s510 = int_to_ptr.vmem [resolvable:$true] %s509
      %515 = dma.vmem_to_hbm [thread:$0]  %s510, 512, %s9, [#allocation5], 256, 256, 16
    $region41: #{ducdiff_forward.2} parent=1 // pred_fallthru
      _
    // Predicated region
    $region42: #{ducdiff_forward.2} parent=1 // pred_check
      _
    $region43: #{ducdiff_forward.2} parent=1 // pred_check_branch
      %517 = sbr.rel (0) target = $region45
    $region44: #{ducdiff_forward.2} parent=1 // pred_region
      %s519 = ssub.s32 512, 512
      %520 = vsyncadd [#allocation5], %s519
      %s521 = sshll.u32 [#allocation6], 4
      %s522 = int_to_ptr.vmem [resolvable:$true] %s521
      %527 = dma.vmem_to_hbm [thread:$0]  %s522, 512, %s10, [#allocation5], 256, 256, 16
    $region45: #{ducdiff_forward.2} parent=1 // pred_fallthru
      _
    // Predicated region
    $region46: #{ducdiff_forward.2} parent=1 // pred_check
      _
    $region47: #{ducdiff_forward.2} parent=1 // pred_check_branch
      %529 = sbr.rel (0) target = $region49
    $region48: #{ducdiff_forward.2} parent=1 // pred_region
      %530 = dma.done [#allocation3], 512
    $region49: #{ducdiff_forward.2} parent=1 // pred_fallthru
      _
    // Predicated region
    $region50: #{ducdiff_forward.2} parent=1 // pred_check
      _
    $region51: #{ducdiff_forward.2} parent=1 // pred_check_branch
      %532 = sbr.rel (0) target = $region53
    $region52: #{ducdiff_forward.2} parent=1 // pred_region
      %533 = dma.done [#allocation5], 512
    $region53: #{ducdiff_forward.2} parent=1 // pred_fallthru
      _
    // Predicated region
    $region54: #{ducdiff_forward.2} parent=1 // pred_check
      _
    $region55: #{ducdiff_forward.2} parent=1 // pred_check_branch
      %535 = sbr.rel (0) target = $region57
    $region56: #{ducdiff_forward.2} parent=1 // pred_region
      %536 = dma.done [#allocation5], 512
    $region57: #{ducdiff_forward.2} parent=1 // pred_fallthru
      _
    %537 = vsyncpa [#allocation3], 1
    %538 = vsyncpa [#allocation5], 1

// kernel: ducdiff_forward.3
$region0: #{ducdiff_forward.3}
  #allocation0 [shape = 'u32[]', space=smem, size = 0x4, offset = 0x4, fixed_abs, tag = 'smem constant byte address 0x4 - core index']
  #allocation1 [shape = 'u32[144,128]{1,0:T(1,128)}', space=vmem, size = 0x12000, scoped, tag = 'internal scratch']
  %s0 = inlined_call_operand.vmem [shape: f32[16,32], index: 0, kind: input, shape index: {}]
  %s1 = inlined_call_operand.vmem [shape: f32[1,32], index: 1, kind: input, shape index: {}]
  %s2 = inlined_call_operand.vmem [shape: f32[1,32], index: 2, kind: input, shape index: {}]
  %s3 = inlined_call_operand.vmem [shape: bf16[32,256], index: 3, kind: input, shape index: {}]
  %s4 = inlined_call_operand.vmem [shape: bf16[32,16], index: 4, kind: input, shape index: {}]
  %s5 = inlined_call_operand.vmem [shape: f32[1,16], index: 5, kind: input, shape index: {}]
  %s6 = inlined_call_operand.vmem [shape: bf16[16,32], index: 6, kind: input, shape index: {}]
  %s7 = inlined_call_operand.hbm [shape: f32[16,256], index: 7, kind: output, shape index: {0}]
  %s8 = inlined_call_operand.hbm [shape: f32[16,256], index: 8, kind: output, shape index: {1}]
  %9 = xla_tuple %s7, %s8
  %s10 = sld [smem:[#allocation0]]
  $region46: #{ducdiff_forward.3} parent=0
    _
  %s12 = ssub.s32 1, %s10
  %s13 = scalar_select 0, %s12, %s10
  $region1: #{ducdiff_forward.3} parent=0
    #allocation2 [shape = 'u8[16384]{0}', space=vmem, size = 0x4000, scoped, tag = 'output window, operand 0, single buffered']
    #allocation3 [shape = 's32[1]{0}', space=sflag, size = 0x4, scoped, tag = 'scoped memory for ducdiff_forward.3']
    #allocation4 [shape = 'u8[16384]{0}', space=vmem, size = 0x4000, scoped, tag = 'output window, operand 1, single buffered']
    #allocation5 [shape = 's32[1]{0}', space=sflag, size = 0x4, scoped, tag = 'scoped memory for ducdiff_forward.3']
    %14 = vsyncpa [#allocation3], 0
    %15 = vsyncpa [#allocation5], 0
    // Predicated region
    $region2: #{ducdiff_forward.3} parent=1 // pred_check
      _
    $region3: #{ducdiff_forward.3} parent=1 // pred_check_branch
      %17 = sbr.rel (0) target = $region5
    $region4: #{ducdiff_forward.3} parent=1 // pred_region
      _
    $region5: #{ducdiff_forward.3} parent=1 // pred_fallthru
      _
    // Predicated region
    $region6: #{ducdiff_forward.3} parent=1 // pred_check
      _
    $region7: #{ducdiff_forward.3} parent=1 // pred_check_branch
      %19 = sbr.rel (0) target = $region9
    $region8: #{ducdiff_forward.3} parent=1 // pred_region
      _
    $region9: #{ducdiff_forward.3} parent=1 // pred_fallthru
      _
    // Predicated region
    $region10: #{ducdiff_forward.3} parent=1 // pred_check
      _
    $region11: #{ducdiff_forward.3} parent=1 // pred_check_branch
      %21 = sbr.rel (0) target = $region13
    $region12: #{ducdiff_forward.3} parent=1 // pred_region
      _
    $region13: #{ducdiff_forward.3} parent=1 // pred_fallthru
      _
    // Predicated region
    $region14: #{ducdiff_forward.3} parent=1 // pred_check
      _
    $region15: #{ducdiff_forward.3} parent=1 // pred_check_branch
      %23 = sbr.rel (0) target = $region17
    $region16: #{ducdiff_forward.3} parent=1 // pred_region
      _
    $region17: #{ducdiff_forward.3} parent=1 // pred_fallthru
      _
    // Predicated region
    $region18: #{ducdiff_forward.3} parent=1 // pred_check
      _
    $region19: #{ducdiff_forward.3} parent=1 // pred_check_branch
      %25 = sbr.rel (0) target = $region21
    $region20: #{ducdiff_forward.3} parent=1 // pred_region
      _
    $region21: #{ducdiff_forward.3} parent=1 // pred_fallthru
      _
    // Predicated region
    $region22: #{ducdiff_forward.3} parent=1 // pred_check
      _
    $region23: #{ducdiff_forward.3} parent=1 // pred_check_branch
      %27 = sbr.rel (0) target = $region25
    $region24: #{ducdiff_forward.3} parent=1 // pred_region
      _
    $region25: #{ducdiff_forward.3} parent=1 // pred_fallthru
      _
    // Predicated region
    $region26: #{ducdiff_forward.3} parent=1 // pred_check
      _
    $region27: #{ducdiff_forward.3} parent=1 // pred_check_branch
      %29 = sbr.rel (0) target = $region29
    $region28: #{ducdiff_forward.3} parent=1 // pred_region
      _
    $region29: #{ducdiff_forward.3} parent=1 // pred_fallthru
      _
    %v31 = vld [vmem:[%s0] sm:$0xff]
    %v32 = vld [vmem:[%s0 + $0x8] sm:$0xff]
    %v33 = vld [vmem:[%s1] sm:$0x1]
    %v34 = vld [vmem:[%s2] sm:$0x1]
    %vm35 = vcmask 261120
    %v36 = vsel %vm35, %v31, 0.0
    %37 = vadd.xlane.f32.xlu0 %v36
    %v38 = vpop.xlane.xlu0 %37
    %v39 = vsel %vm35, %v32, 0.0
    %40 = vadd.xlane.f32.xlu0 %v39
    %v41 = vpop.xlane.xlu0 %40
    %v42 = vrcp.pop 32.0
    %v43 = vmul.f32 %v38, %v42
    %v44 = vmul.f32 %v41, %v42
    %v45 = vsub.f32 %v31, %v43
    %v46 = vsub.f32 %v32, %v44
    %v47 = vmul.f32 %v45, %v45
    %v48 = vmul.f32 %v46, %v46
    %v49 = vsel %vm35, %v47, 0.0
    %50 = vadd.xlane.f32.xlu0 %v49
    %v51 = vpop.xlane.xlu0 %50
    %v52 = vsel %vm35, %v48, 0.0
    %53 = vadd.xlane.f32.xlu0 %v52
    %v54 = vpop.xlane.xlu0 %53
    %v55 = vmul.f32 %v51, %v42
    %v56 = vmul.f32 %v54, %v42
    %v57 = vadd.f32 %v55, 1e-12
    %v58 = vadd.f32 %v56, 1e-12
    %v59 = vrsqrt.pop %v57
    %v60 = vrsqrt.pop %v58
    %v61 = vmul.f32 %v45, %v59
    %v62 = vmul.f32 %v46, %v60
    %v64 = vlaneseq
    %v65 = vshrl.u32 %v64, 7
    %v66 = vsub.s32 0, %v65
    %v67 = vrot.slane %v33, %v66
    %v69 = vmul.f32 %v67, %v61
    %v70 = vmul.f32 %v67, %v62
    %v72 = vlaneseq
    %v73 = vshrl.u32 %v72, 7
    %v74 = vsub.s32 0, %v73
    %v75 = vrot.slane %v34, %v74
    %v77 = vadd.f32 %v69, %v75
    %v78 = vadd.f32 %v70, %v75
    %v79 = vpack.c.bf16 %v78, %v77
    %v80 = vld [vmem:[%s3] sm:$0xff]
    %v81 = vld [vmem:[%s3 + $0x8] sm:$0xff]
    %v82 = vld [vmem:[%s3 + $0x10] sm:$0xff]
    %v83 = vld [vmem:[%s3 + $0x18] sm:$0xff]
    %v88 = vunpack.c.l.b16 %v80
    %v89 = vunpack.c.h.b16 %v80
    %v90 = vunpack.c.l.b16 %v81
    %v91 = vunpack.c.h.b16 %v81
    %v92 = vunpack.c.l.b16 %v82
    %v93 = vunpack.c.h.b16 %v82
    %v94 = vunpack.c.l.b16 %v83
    %v95 = vunpack.c.h.b16 %v83
    %v96 = vpack.c.b16 %v90, %v88
    %v97 = vpack.c.b16 %v91, %v89
    %v98 = vpack.c.b16 %v94, %v92
    %v99 = vpack.c.b16 %v95, %v93
    %v105 = vsel %vm35, %v79, 0
    %107 = vmatprep.subr.bf16.mxu0 0
    %108 = vmatpush1.bf16.msra.mxu0 0
    %109 = vmatprep.subr.bf16.mxu0 0
    %110 = vmatpush1.bf16.msra.mxu0 0
    %111 = vmatprep.subr.bf16.mxu0 0
    %112 = vmatpush1.bf16.msra.mxu0 0
    %113 = vmatprep.subr.bf16.mxu0 0
    %114 = vmatpush1.bf16.msra.mxu0 0
    %115 = vmatprep.subr.bf16.mxu0 0
    %116 = vmatpush1.bf16.msra.mxu0 0
    %117 = vmatprep.subr.bf16.mxu0 0
    %118 = vmatpush1.bf16.msra.mxu0 0
    %119 = vmatprep.subr.bf16.mxu0 %v99
    %120 = vmatpush1.bf16.msra.mxu0 %v98
    %121 = vmatprep.subr.bf16.mxu0 %v97
    %122 = vmatpush1.bf16.msra.mxu0 %v96
    %123 = vmatprep.subr.bf16.mxu0 0
    %124 = vmatpush2.bf16.msra.mxu0 0
    %125 = vmatprep.subr.bf16.mxu0 0
    %126 = vmatpush2.bf16.msra.mxu0 0
    %127 = vmatprep.subr.bf16.mxu0 0
    %128 = vmatpush2.bf16.msra.mxu0 0
    %129 = vmatprep.subr.bf16.mxu0 0
    %130 = vmatpush2.bf16.msra.mxu0 0
    %131 = vmatprep.subr.bf16.mxu0 0
    %132 = vmatpush2.bf16.msra.mxu0 0
    %133 = vmatprep.subr.bf16.mxu0 0
    %134 = vmatpush2.bf16.msra.mxu0 0
    %135 = vmatprep.subr.bf16.mxu0 0
    %136 = vmatpush2.bf16.msra.mxu0 0
    %137 = vmatprep.subr.bf16.mxu0 0
    %138 = vmatpush2.bf16.msra.mxu0 0
    %139 = vmatprep.mubr.bf16.mxu0 0
    %140 = vmatmul.mubr.bf16.gmra.mxu0 %v105
    %v141 = vpop.f32.mrf.mxu0
    %v142 = vadd.f32 0.0, %v141
    %v143 = vpop.f32.mrf.mxu0
    %v144 = vadd.f32 0.0, %v143
    %v145 = vpop.f32.mrf.mxu0
    %v146 = vadd.f32 0.0, %v145
    %v147 = vpop.f32.mrf.mxu0
    %v148 = vadd.f32 0.0, %v147
    %149 = vdwg.mxu0
    %150 = vst [vmem:[#allocation2] sm:$0xff] %v142
    %151 = vst [vmem:[#allocation2 + $0x8] sm:$0xff] %v144
    %152 = vst [vmem:[#allocation2 + $0x10] sm:$0xff] %v146
    %153 = vst [vmem:[#allocation2 + $0x18] sm:$0xff] %v148
    %v154 = vld [vmem:[%s4] sm:$0xf]
    %v155 = vld [vmem:[%s4 + $0x4] sm:$0xf]
    %v156 = vld [vmem:[%s4 + $0x8] sm:$0xf]
    %v157 = vld [vmem:[%s4 + $0xc] sm:$0xf]
    %v158 = vld [vmem:[%s5] sm:$0x1]
    %v160 = vlaneseq
    %v161 = vshrl.u32 %v160, 7
    %v162 = vsub.s32 0, %v161
    %v163 = vrot.slane %v158, %v162
    %v169 = vunpack.c.l.b16 %v154
    %v170 = vunpack.c.l.b16 %v155
    %v171 = vunpack.c.l.b16 %v156
    %v172 = vunpack.c.l.b16 %v157
    %v173 = vpack.c.b16 %v170, %v169
    %v174 = vpack.c.b16 %v172, %v171
    %177 = vmatprep.subr.bf16.mxu0 0
    %178 = vmatpush1.bf16.msra.mxu0 0
    %179 = vmatprep.subr.bf16.mxu0 0
    %180 = vmatpush1.bf16.msra.mxu0 0
    %181 = vmatprep.subr.bf16.mxu0 0
    %182 = vmatpush1.bf16.msra.mxu0 0
    %183 = vmatprep.subr.bf16.mxu0 0
    %184 = vmatpush1.bf16.msra.mxu0 0
    %185 = vmatprep.subr.bf16.mxu0 0
    %186 = vmatpush1.bf16.msra.mxu0 0
    %187 = vmatprep.subr.bf16.mxu0 0
    %188 = vmatpush1.bf16.msra.mxu0 0
    %189 = vmatprep.subr.bf16.mxu0 0
    %190 = vmatpush1.bf16.msra.mxu0 %v174
    %191 = vmatprep.subr.bf16.mxu0 0
    %192 = vmatpush1.bf16.msra.mxu0 %v173
    %193 = vmatprep.subr.bf16.mxu0 0
    %194 = vmatpush2.bf16.msra.mxu0 0
    %195 = vmatprep.subr.bf16.mxu0 0
    %196 = vmatpush2.bf16.msra.mxu0 0
    %197 = vmatprep.subr.bf16.mxu0 0
    %198 = vmatpush2.bf16.msra.mxu0 0
    %199 = vmatprep.subr.bf16.mxu0 0
    %200 = vmatpush2.bf16.msra.mxu0 0
    %201 = vmatprep.subr.bf16.mxu0 0
    %202 = vmatpush2.bf16.msra.mxu0 0
    %203 = vmatprep.subr.bf16.mxu0 0
    %204 = vmatpush2.bf16.msra.mxu0 0
    %205 = vmatprep.subr.bf16.mxu0 0
    %206 = vmatpush2.bf16.msra.mxu0 0
    %207 = vmatprep.subr.bf16.mxu0 0
    %208 = vmatpush2.bf16.msra.mxu0 0
    %209 = vmatprep.mubr.bf16.mxu0 0
    %210 = vmatmul.mubr.bf16.gmra.mxu0 %v105
    %v211 = vpop.f32.mrf.mxu0
    %v212 = vadd.f32 %v163, %v211
    %v213 = vpop.f32.mrf.mxu0
    %v214 = vpop.f32.mrf.mxu0
    %v215 = vadd.f32 %v163, %v214
    %v216 = vpop.f32.mrf.mxu0
    %217 = vdwg.mxu0
    %v218 = vld [vmem:[%s6] sm:$0xf]
    %v219 = vld [vmem:[%s6 + $0x4] sm:$0xf]
    %v220 = vld [vmem:[%s3] sm:$0xff]
    %v221 = vld [vmem:[%s3 + $0x8] sm:$0xff]
    %v222 = vld [vmem:[%s3 + $0x10] sm:$0xff]
    %v223 = vld [vmem:[%s3 + $0x18] sm:$0xff]
    %v226 = vunpack.c.l.b16 %v218
    %v227 = vunpack.c.l.b16 %v219
    %v228 = vpack.c.b16 %v227, %v226
    %v233 = vunpack.c.l.b16 %v220
    %v234 = vunpack.c.h.b16 %v220
    %v235 = vunpack.c.l.b16 %v221
    %v236 = vunpack.c.h.b16 %v221
    %v237 = vunpack.c.l.b16 %v222
    %v238 = vunpack.c.h.b16 %v222
    %v239 = vunpack.c.l.b16 %v223
    %v240 = vunpack.c.h.b16 %v223
    %v241 = vpack.c.b16 %v235, %v233
    %v242 = vpack.c.b16 %v236, %v234
    %v243 = vpack.c.b16 %v239, %v237
    %v244 = vpack.c.b16 %v240, %v238
    %v250 = vsel %vm35, %v228, 0
    %252 = vmatprep.subr.bf16.mxu0 0
    %253 = vmatpush1.bf16.msra.mxu0 0
    %254 = vmatprep.subr.bf16.mxu0 0
    %255 = vmatpush1.bf16.msra.mxu0 0
    %256 = vmatprep.subr.bf16.mxu0 0
    %257 = vmatpush1.bf16.msra.mxu0 0
    %258 = vmatprep.subr.bf16.mxu0 0
    %259 = vmatpush1.bf16.msra.mxu0 0
    %260 = vmatprep.subr.bf16.mxu0 0
    %261 = vmatpush1.bf16.msra.mxu0 0
    %262 = vmatprep.subr.bf16.mxu0 0
    %263 = vmatpush1.bf16.msra.mxu0 0
    %264 = vmatprep.subr.bf16.mxu0 %v244
    %265 = vmatpush1.bf16.msra.mxu0 %v243
    %266 = vmatprep.subr.bf16.mxu0 %v242
    %267 = vmatpush1.bf16.msra.mxu0 %v241
    %268 = vmatprep.subr.bf16.mxu0 0
    %269 = vmatpush2.bf16.msra.mxu0 0
    %270 = vmatprep.subr.bf16.mxu0 0
    %271 = vmatpush2.bf16.msra.mxu0 0
    %272 = vmatprep.subr.bf16.mxu0 0
    %273 = vmatpush2.bf16.msra.mxu0 0
    %274 = vmatprep.subr.bf16.mxu0 0
    %275 = vmatpush2.bf16.msra.mxu0 0
    %276 = vmatprep.subr.bf16.mxu0 0
    %277 = vmatpush2.bf16.msra.mxu0 0
    %278 = vmatprep.subr.bf16.mxu0 0
    %279 = vmatpush2.bf16.msra.mxu0 0
    %280 = vmatprep.subr.bf16.mxu0 0
    %281 = vmatpush2.bf16.msra.mxu0 0
    %282 = vmatprep.subr.bf16.mxu0 0
    %283 = vmatpush2.bf16.msra.mxu0 0
    %284 = vmatprep.mubr.bf16.mxu0 0
    %285 = vmatmul.mubr.bf16.gmra.mxu0 %v250
    %v286 = vpop.f32.mrf.mxu0
    %v287 = vadd.f32 0.0, %v286
    %v288 = vpop.f32.mrf.mxu0
    %v289 = vadd.f32 0.0, %v288
    %v290 = vpop.f32.mrf.mxu0
    %v291 = vadd.f32 0.0, %v290
    %v292 = vpop.f32.mrf.mxu0
    %v293 = vadd.f32 0.0, %v292
    %294 = vdwg.mxu0
    %v295 = vpack.c.bf16 %v215, %v212
    %v296 = vpack.c.bf16 %v291, %v287
    %v297 = vpack.c.bf16 %v293, %v289
    %vm298 = vcmask 130048
    %v300 = vsel %vm298, %v295, 0
    %302 = vmatprep.subr.bf16.mxu0 0
    %303 = vmatpush1.bf16.msra.mxu0 0
    %304 = vmatprep.subr.bf16.mxu0 0
    %305 = vmatpush1.bf16.msra.mxu0 0
    %306 = vmatprep.subr.bf16.mxu0 0
    %307 = vmatpush1.bf16.msra.mxu0 0
    %308 = vmatprep.subr.bf16.mxu0 0
    %309 = vmatpush1.bf16.msra.mxu0 0
    %310 = vmatprep.subr.bf16.mxu0 0
    %311 = vmatpush1.bf16.msra.mxu0 0
    %312 = vmatprep.subr.bf16.mxu0 0
    %313 = vmatpush1.bf16.msra.mxu0 0
    %314 = vmatprep.subr.bf16.mxu0 0
    %315 = vmatpush1.bf16.msra.mxu0 0
    %316 = vmatprep.subr.bf16.mxu0 %v297
    %317 = vmatpush1.bf16.msra.mxu0 %v296
    %318 = vmatprep.subr.bf16.mxu0 0
    %319 = vmatpush2.bf16.msra.mxu0 0
    %320 = vmatprep.subr.bf16.mxu0 0
    %321 = vmatpush2.bf16.msra.mxu0 0
    %322 = vmatprep.subr.bf16.mxu0 0
    %323 = vmatpush2.bf16.msra.mxu0 0
    %324 = vmatprep.subr.bf16.mxu0 0
    %325 = vmatpush2.bf16.msra.mxu0 0
    %326 = vmatprep.subr.bf16.mxu0 0
    %327 = vmatpush2.bf16.msra.mxu0 0
    %328 = vmatprep.subr.bf16.mxu0 0
    %329 = vmatpush2.bf16.msra.mxu0 0
    %330 = vmatprep.subr.bf16.mxu0 0
    %331 = vmatpush2.bf16.msra.mxu0 0
    %332 = vmatprep.subr.bf16.mxu0 0
    %333 = vmatpush2.bf16.msra.mxu0 0
    %334 = vmatprep.mubr.bf16.mxu0 0
    %335 = vmatmul.mubr.bf16.gmra.mxu0 %v300
    %v336 = vpop.f32.mrf.mxu0
    %v337 = vadd.f32 0.0, %v336
    %v338 = vpop.f32.mrf.mxu0
    %v339 = vadd.f32 0.0, %v338
    %v340 = vpop.f32.mrf.mxu0
    %v341 = vadd.f32 0.0, %v340
    %v342 = vpop.f32.mrf.mxu0
    %v343 = vadd.f32 0.0, %v342
    %344 = vdwg.mxu0
    %345 = vst [vmem:[#allocation4] sm:$0xff] %v337
    %346 = vst [vmem:[#allocation4 + $0x8] sm:$0xff] %v339
    %347 = vst [vmem:[#allocation4 + $0x10] sm:$0xff] %v341
    %348 = vst [vmem:[#allocation4 + $0x18] sm:$0xff] %v343
    // Predicated region
    $region30: #{ducdiff_forward.3} parent=1 // pred_check
      _
    $region31: #{ducdiff_forward.3} parent=1 // pred_check_branch
      %350 = sbr.rel (0) target = $region33
    $region32: #{ducdiff_forward.3} parent=1 // pred_region
      %s352 = ssub.s32 512, 512
      %353 = vsyncadd [#allocation3], %s352
      %s354 = sshll.u32 [#allocation2], 4
      %s355 = int_to_ptr.vmem [resolvable:$true] %s354
      %360 = dma.vmem_to_hbm [thread:$0]  %s355, 512, %s7, [#allocation3], 256, 256, 16
    $region33: #{ducdiff_forward.3} parent=1 // pred_fallthru
      _
    // Predicated region
    $region34: #{ducdiff_forward.3} parent=1 // pred_check
      _
    $region35: #{ducdiff_forward.3} parent=1 // pred_check_branch
      %362 = sbr.rel (0) target = $region37
    $region36: #{ducdiff_forward.3} parent=1 // pred_region
      %s364 = ssub.s32 512, 512
      %365 = vsyncadd [#allocation5], %s364
      %s366 = sshll.u32 [#allocation4], 4
      %s367 = int_to_ptr.vmem [resolvable:$true] %s366
      %372 = dma.vmem_to_hbm [thread:$0]  %s367, 512, %s8, [#allocation5], 256, 256, 16
    $region37: #{ducdiff_forward.3} parent=1 // pred_fallthru
      _
    // Predicated region
    $region38: #{ducdiff_forward.3} parent=1 // pred_check
      _
    $region39: #{ducdiff_forward.3} parent=1 // pred_check_branch
      %374 = sbr.rel (0) target = $region41
    $region40: #{ducdiff_forward.3} parent=1 // pred_region
      %375 = dma.done [#allocation3], 512
    $region41: #{ducdiff_forward.3} parent=1 // pred_fallthru
      _
    // Predicated region
    $region42: #{ducdiff_forward.3} parent=1 // pred_check
      _
    $region43: #{ducdiff_forward.3} parent=1 // pred_check_branch
      %377 = sbr.rel (0) target = $region45
    $region44: #{ducdiff_forward.3} parent=1 // pred_region
      %378 = dma.done [#allocation5], 512
    $region45: #{ducdiff_forward.3} parent=1 // pred_fallthru
      _
    %379 = vsyncpa [#allocation3], 1
    %380 = vsyncpa [#allocation5], 1

</llo_original>
